<compile_context>
chip_gen: v5e
topology: v5e:2x2
jax: 0.10.0
libtpu: 0.0.40
codegen_flags: <defaults>
</compile_context>

<pallas_src>
import jax
import jax.numpy as jnp
from jax.experimental import pallas as pl
from jax.experimental.pallas import tpu as pltpu

HEAD_PAD = 128  # fused head output padded to one full lane width


def _round_up(n, m):
    return ((n + m - 1) // m) * m


def policy_kernel(x_ref,
                  w1_ref, b1_ref,
                  w2_ref, b2_ref,
                  wh_ref, bh_ref,
                  out_ref):
    cdt = w1_ref.dtype  # MXU input dtype (bf16 by default, f32 for parity)

    x = x_ref[...].astype(cdt)

    # fc1 + relu (f32 accumulate, f32 bias/ReLU)
    h = jnp.dot(x, w1_ref[...], preferred_element_type=jnp.float32) + b1_ref[...]
    h = jnp.maximum(h, 0.0)

    # fc2 + relu
    h = jnp.dot(h.astype(cdt), w2_ref[...],
                preferred_element_type=jnp.float32) + b2_ref[...]
    h = jnp.maximum(h, 0.0)

    # fused heads: one lane-dense [tile_b, 128] store (columns beyond the real
    # head widths are zero-padded; sliced lazily by the caller).
    out_ref[...] = (
        jnp.dot(h.astype(cdt), wh_ref[...],
                preferred_element_type=jnp.float32) + bh_ref[...]
    )


def prepare_params(params, compute_dtype=jnp.bfloat16):
    """Build kernel-ready params ONCE (fused head slab + dtype casts).

    params: dict of (W[in,out], b[1,out]) pairs as produced by make_params.
    compute_dtype: MXU input dtype (bf16 recommended on v6e/v7x; f32 for
                   strict parity with the PyTorch reference).
    """
    (w1, b1) = params["fc1"]
    (w2, b2) = params["fc2"]
    (wa, ba) = params["action_type_head"]
    (wr, br) = params["raise_head"]
    (wd, bd) = params["discard_head"]

    hidden = w1.shape[1]
    n_act, n_raise, n_disc = wa.shape[1], wr.shape[1], wd.shape[1]
    n_heads = n_act + n_raise + n_disc
    assert n_heads <= HEAD_PAD, "fused head width exceeds one lane width"

    wh = jnp.zeros((hidden, HEAD_PAD), jnp.float32).at[:, :n_heads].set(
        jnp.concatenate([wa, wr, wd], axis=1))
    bh = jnp.zeros((1, HEAD_PAD), jnp.float32).at[:, :n_heads].set(
        jnp.concatenate([ba, br, bd], axis=1))

    return {
        "w1": w1.astype(compute_dtype), "b1": b1.astype(jnp.float32),
        "w2": w2.astype(compute_dtype), "b2": b2.astype(jnp.float32),
        "wh": wh.astype(compute_dtype), "bh": bh.astype(jnp.float32),
        "head_widths": (n_act, n_raise, n_disc),
    }


def policy_network_forward(x, kparams, tile_b=2048, return_fused=False):
    """x: [B, input_dim] float32. kparams: output of prepare_params.

    Returns (action_type_logits, raise_logits, discard_logits) or, with
    return_fused=True, the fused [B, 128] logits slab (columns
    [0:5]/[5:105]/[105:108]) to avoid extra output-slicing HBM traffic.
    tile_b: max batch rows per grid step (large tiles amortize the ~0.35 us
            per-step pipeline overhead on all of v5e/v6e/v7x).
    """
    w1, b1 = kparams["w1"], kparams["b1"]
    w2, b2 = kparams["w2"], kparams["b2"]
    wh, bh = kparams["wh"], kparams["bh"]
    n_act, n_raise, n_disc = kparams["head_widths"]
    n_heads = n_act + n_raise + n_disc

    in_dim, hidden = w1.shape

    # Pad only when B is tiny (< one sublane group); otherwise the partial
    # last tile is handled by the pipeline's boundary masking.
    orig_B = x.shape[0]
    if orig_B < 8:
        x = jnp.pad(x, ((0, 8 - orig_B), (0, 0)))
    B = x.shape[0]

    # Batch tile: as large as tile_b, but capped so the grid has >= 2 tiles
    # for moderate B (keeps both v7x TensorCores busy on the "parallel" axis).
    tb = min(_round_up(int(tile_b), 8), _round_up(pl.cdiv(B, 2), 8))
    tb = max(tb, 8)
    grid = (pl.cdiv(B, tb),)

    wbytes = (w1.size * w1.dtype.itemsize + w2.size * w2.dtype.itemsize
              + wh.size * wh.dtype.itemsize
              + 4 * (b1.size + b2.size + bh.size))
    flops = 2 * B * (in_dim * hidden + hidden * hidden + hidden * HEAD_PAD)
    bytes_accessed = 4 * x.size + wbytes + 4 * B * HEAD_PAD
    cost = pl.CostEstimate(flops=flops, transcendentals=0,
                           bytes_accessed=bytes_accessed)

    fused = pl.pallas_call(
        policy_kernel,
        out_shape=jax.ShapeDtypeStruct((B, HEAD_PAD), jnp.float32),
        grid_spec=pltpu.PrefetchScalarGridSpec(
            num_scalar_prefetch=0,
            grid=grid,
            in_specs=[
                # x: tiled over batch, auto double-buffered.
                pl.BlockSpec((tb, in_dim), lambda i: (i, 0)),
                # weights / biases: resident across the whole grid.
                pl.BlockSpec((in_dim, hidden), lambda i: (0, 0)),
                pl.BlockSpec((1, hidden), lambda i: (0, 0)),
                pl.BlockSpec((hidden, hidden), lambda i: (0, 0)),
                pl.BlockSpec((1, hidden), lambda i: (0, 0)),
                pl.BlockSpec((hidden, HEAD_PAD), lambda i: (0, 0)),
                pl.BlockSpec((1, HEAD_PAD), lambda i: (0, 0)),
            ],
            out_specs=pl.BlockSpec((tb, HEAD_PAD), lambda i: (i, 0)),
        ),
        compiler_params=pltpu.CompilerParams(
            dimension_semantics=("parallel",)),
        cost_estimate=cost,
    )(x, w1, b1, w2, b2, wh, bh)

    if orig_B != B:
        fused = fused[:orig_B]
    if return_fused:
        return fused
    return (fused[:, :n_act],
            fused[:, n_act:n_act + n_raise],
            fused[:, n_act + n_raise:n_heads])


def init_linear(key, in_features, out_features):
    """PyTorch nn.Linear default init: U(-1/sqrt(fan_in), 1/sqrt(fan_in))."""
    kw, kb = jax.random.split(key)
    bound = 1.0 / jnp.sqrt(jnp.float32(in_features))
    # Stored as [in, out] so the kernel does x @ W.
    w = jax.random.uniform(kw, (in_features, out_features), jnp.float32,
                           minval=-bound, maxval=bound)
    b = jax.random.uniform(kb, (1, out_features), jnp.float32,
                           minval=-bound, maxval=bound)
    return w, b


def make_params(key, input_dim, hidden_dim=128, num_action_types=5,
                num_raise_classes=100, num_discard_classes=3):
    keys = jax.random.split(key, 5)
    return {
        "fc1": init_linear(keys[0], input_dim, hidden_dim),
        "fc2": init_linear(keys[1], hidden_dim, hidden_dim),
        "action_type_head": init_linear(keys[2], hidden_dim, num_action_types),
        "raise_head": init_linear(keys[3], hidden_dim, num_raise_classes),
        "discard_head": init_linear(keys[4], hidden_dim, num_discard_classes),
    }


def reference_forward(x, params):
    """Pure-JAX f32 reference matching the PyTorch forward."""
    (w1, b1) = params["fc1"]
    (w2, b2) = params["fc2"]
    (wa, ba) = params["action_type_head"]
    (wr, br) = params["raise_head"]
    (wd, bd) = params["discard_head"]
    h = jnp.maximum(x @ w1 + b1, 0.0)
    h = jnp.maximum(h @ w2 + b2, 0.0)
    return (h @ wa + ba, h @ wr + br, h @ wd + bd)


if __name__ == "__main__":
    key = jax.random.PRNGKey(0)
    k_params, k_x_small, k_x_big = jax.random.split(key, 3)

    input_dim = 32
    hidden_dim = 128
    params = make_params(k_params, input_dim, hidden_dim)

    # ---- f32 compute path: strict 1e-5 parity, single tile ----
    kp_f32 = prepare_params(params, compute_dtype=jnp.float32)
    batch = 8
    x = jax.random.normal(k_x_small, (batch, input_dim), jnp.float32)
    act_logits, raise_logits, disc_logits = jax.block_until_ready(
        policy_network_forward(x, kp_f32)
    )
    ref_act, ref_raise, ref_disc = reference_forward(x, params)
    assert act_logits.shape == (batch, 5)
    assert raise_logits.shape == (batch, 100)
    assert disc_logits.shape == (batch, 3)
    assert jnp.allclose(act_logits, ref_act, atol=1e-5)
    assert jnp.allclose(raise_logits, ref_raise, atol=1e-5)
    assert jnp.allclose(disc_logits, ref_disc, atol=1e-5)

    # ---- bf16 compute path (default): larger, non-multiple batch that
    # exercises the multi-tile grid (>= 2 tiles -> both v7x TCs) and the
    # partial-last-tile boundary handling. Tolerance relaxed for bf16 MXU
    # inputs with f32 accumulation. ----
    kp_bf16 = prepare_params(params)  # bf16 weights
    big_batch = 300
    xb = jax.random.normal(k_x_big, (big_batch, input_dim), jnp.float32)
    a2, r2, d2 = jax.block_until_ready(
        policy_network_forward(xb, kp_bf16, tile_b=2048)
    )
    ra2, rr2, rd2 = reference_forward(xb, params)
    assert a2.shape == (big_batch, 5)
    assert r2.shape == (big_batch, 100)
    assert d2.shape == (big_batch, 3)
    assert jnp.allclose(a2, ra2, atol=5e-2)
    assert jnp.allclose(r2, rr2, atol=5e-2)
    assert jnp.allclose(d2, rd2, atol=5e-2)

    # Fused-output path (no wrapper-side slicing / extra HBM traffic).
    fused = jax.block_until_ready(
        policy_network_forward(xb, kp_bf16, tile_b=2048, return_fused=True)
    )
    assert fused.shape == (big_batch, HEAD_PAD)
    assert jnp.allclose(fused[:, :5], ra2, atol=5e-2)

    print("KERNEL_OK")
</pallas_src>

<mosaic_0001>
module attributes {stable_mosaic.version = 11 : i64} {
  func.func @policy_kernel(%arg0: i32, %arg1: memref<8x32xf32, #tpu.memory_space<vmem>>, %arg2: memref<32x128xf32, #tpu.memory_space<vmem>>, %arg3: memref<1x128xf32, #tpu.memory_space<vmem>>, %arg4: memref<128x128xf32, #tpu.memory_space<vmem>>, %arg5: memref<1x128xf32, #tpu.memory_space<vmem>>, %arg6: memref<128x128xf32, #tpu.memory_space<vmem>>, %arg7: memref<1x128xf32, #tpu.memory_space<vmem>>, %arg8: memref<8x128xf32, #tpu.memory_space<vmem>>) attributes {dimension_semantics = [#tpu.dimension_semantics<parallel>], iteration_bounds = array<i64: 1>, scalar_prefetch = 0 : i64, scratch_operands = 0 : i64, tpu.core_type = #tpu.core_type<tc>, window_params = [{transform_indices = @transform_0, window_bounds = array<i64: 8, 32>}, {pipeline_mode = #tpu.pipeline_mode<synchronous>, transform_indices = @transform_1, window_bounds = array<i64: 32, 128>}, {pipeline_mode = #tpu.pipeline_mode<synchronous>, transform_indices = @transform_2, window_bounds = array<i64: 1, 128>}, {pipeline_mode = #tpu.pipeline_mode<synchronous>, transform_indices = @transform_3, window_bounds = array<i64: 128, 128>}, {pipeline_mode = #tpu.pipeline_mode<synchronous>, transform_indices = @transform_4, window_bounds = array<i64: 1, 128>}, {pipeline_mode = #tpu.pipeline_mode<synchronous>, transform_indices = @transform_5, window_bounds = array<i64: 128, 128>}, {pipeline_mode = #tpu.pipeline_mode<synchronous>, transform_indices = @transform_6, window_bounds = array<i64: 1, 128>}, {transform_indices = @transform_7, window_bounds = array<i64: 8, 128>}]} {
    %c0 = arith.constant 0 : index
    %c0_0 = arith.constant 0 : index
    %0 = vector.load %arg1[%c0, %c0_0] : memref<8x32xf32, #tpu.memory_space<vmem>>, vector<8x32xf32>
    %c0_1 = arith.constant 0 : index
    %c0_2 = arith.constant 0 : index
    %1 = vector.load %arg2[%c0_1, %c0_2] : memref<32x128xf32, #tpu.memory_space<vmem>>, vector<32x128xf32>
    %cst = arith.constant dense<0.000000e+00> : vector<8x128xf32>
    %2 = tpu.matmul %0, %1, %cst {dimension_numbers = #tpu.dot_dimension_numbers<[1], [0], [0], [1], [0, 0, 1, 1], [], []>} : vector<8x32xf32>, vector<32x128xf32>, vector<8x128xf32> -> vector<8x128xf32>
    %c0_3 = arith.constant 0 : index
    %c0_4 = arith.constant 0 : index
    %3 = vector.load %arg3[%c0_3, %c0_4] : memref<1x128xf32, #tpu.memory_space<vmem>>, vector<1x128xf32>
    %4 = vector.broadcast %3 : vector<1x128xf32> to vector<8x128xf32>
    %5 = arith.addf %2, %4 : vector<8x128xf32>
    %cst_5 = arith.constant 0.000000e+00 : f32
    %6 = vector.broadcast %cst_5 : f32 to vector<8x128xf32>
    %7 = arith.maximumf %5, %6 : vector<8x128xf32>
    %c0_6 = arith.constant 0 : index
    %c0_7 = arith.constant 0 : index
    %8 = vector.load %arg4[%c0_6, %c0_7] : memref<128x128xf32, #tpu.memory_space<vmem>>, vector<128x128xf32>
    %cst_8 = arith.constant dense<0.000000e+00> : vector<8x128xf32>
    %9 = tpu.matmul %7, %8, %cst_8 {dimension_numbers = #tpu.dot_dimension_numbers<[1], [0], [0], [1], [0, 0, 1, 1], [], []>} : vector<8x128xf32>, vector<128x128xf32>, vector<8x128xf32> -> vector<8x128xf32>
    %c0_9 = arith.constant 0 : index
    %c0_10 = arith.constant 0 : index
    %10 = vector.load %arg5[%c0_9, %c0_10] : memref<1x128xf32, #tpu.memory_space<vmem>>, vector<1x128xf32>
    %11 = vector.broadcast %10 : vector<1x128xf32> to vector<8x128xf32>
    %12 = arith.addf %9, %11 : vector<8x128xf32>
    %cst_11 = arith.constant 0.000000e+00 : f32
    %13 = vector.broadcast %cst_11 : f32 to vector<8x128xf32>
    %14 = arith.maximumf %12, %13 : vector<8x128xf32>
    %c0_12 = arith.constant 0 : index
    %c0_13 = arith.constant 0 : index
    %15 = vector.load %arg6[%c0_12, %c0_13] : memref<128x128xf32, #tpu.memory_space<vmem>>, vector<128x128xf32>
    %cst_14 = arith.constant dense<0.000000e+00> : vector<8x128xf32>
    %16 = tpu.matmul %14, %15, %cst_14 {dimension_numbers = #tpu.dot_dimension_numbers<[1], [0], [0], [1], [0, 0, 1, 1], [], []>} : vector<8x128xf32>, vector<128x128xf32>, vector<8x128xf32> -> vector<8x128xf32>
    %c0_15 = arith.constant 0 : index
    %c0_16 = arith.constant 0 : index
    %17 = vector.load %arg7[%c0_15, %c0_16] : memref<1x128xf32, #tpu.memory_space<vmem>>, vector<1x128xf32>
    %18 = vector.broadcast %17 : vector<1x128xf32> to vector<8x128xf32>
    %19 = arith.addf %16, %18 : vector<8x128xf32>
    %c0_17 = arith.constant 0 : index
    %c0_18 = arith.constant 0 : index
    %20 = vector.load %arg8[%c0_17, %c0_18] : memref<8x128xf32, #tpu.memory_space<vmem>>, vector<8x128xf32>
    tpu.vector_store %arg8[%c0_17, %c0_18], %19 {strides = array<i32>} : memref<8x128xf32, #tpu.memory_space<vmem>>, vector<8x128xf32>,
    return
  }
  func.func @transform_0(%arg0: i32) -> (i32, i32) {
    %c0_i32 = arith.constant 0 : i32
    %c0_i32_0 = arith.constant 0 : i32
    return %arg0, %c0_i32 : i32, i32
  }
  func.func @transform_1(%arg0: i32) -> (i32, i32) {
    %c0_i32 = arith.constant 0 : i32
    %c0_i32_0 = arith.constant 0 : i32
    %c0_i32_1 = arith.constant 0 : i32
    return %c0_i32, %c0_i32_0 : i32, i32
  }
  func.func @transform_2(%arg0: i32) -> (i32, i32) {
    %c0_i32 = arith.constant 0 : i32
    %c0_i32_0 = arith.constant 0 : i32
    %c0_i32_1 = arith.constant 0 : i32
    return %c0_i32, %c0_i32_0 : i32, i32
  }
  func.func @transform_3(%arg0: i32) -> (i32, i32) {
    %c0_i32 = arith.constant 0 : i32
    %c0_i32_0 = arith.constant 0 : i32
    %c0_i32_1 = arith.constant 0 : i32
    return %c0_i32, %c0_i32_0 : i32, i32
  }
  func.func @transform_4(%arg0: i32) -> (i32, i32) {
    %c0_i32 = arith.constant 0 : i32
    %c0_i32_0 = arith.constant 0 : i32
    %c0_i32_1 = arith.constant 0 : i32
    return %c0_i32, %c0_i32_0 : i32, i32
  }
  func.func @transform_5(%arg0: i32) -> (i32, i32) {
    %c0_i32 = arith.constant 0 : i32
    %c0_i32_0 = arith.constant 0 : i32
    %c0_i32_1 = arith.constant 0 : i32
    return %c0_i32, %c0_i32_0 : i32, i32
  }
  func.func @transform_6(%arg0: i32) -> (i32, i32) {
    %c0_i32 = arith.constant 0 : i32
    %c0_i32_0 = arith.constant 0 : i32
    %c0_i32_1 = arith.constant 0 : i32
    return %c0_i32, %c0_i32_0 : i32, i32
  }
  func.func @transform_7(%arg0: i32) -> (i32, i32) {
    %c0_i32 = arith.constant 0 : i32
    %c0_i32_0 = arith.constant 0 : i32
    return %arg0, %c0_i32 : i32, i32
  }
}

</mosaic_0001>

<llo_original>
// kernel: tpu_custom_call.1
$region0: #{tpu_custom_call.1}
  #allocation0 [shape = 'u32[]', space=smem, size = 0x4, offset = 0x4, fixed_abs, tag = 'smem constant byte address 0x4 - core index']
  #allocation1 [shape = 'u32[72,128]{1,0:T(1,128)}', space=vmem, size = 0x9000, scoped, tag = 'internal scratch']
  %s0 = inlined_call_operand.hbm [shape: f32[8,32], index: 0, kind: input, shape index: {}]
  %s1 = inlined_call_operand.hbm [shape: f32[32,128], index: 1, kind: input, shape index: {}]
  %s2 = inlined_call_operand.vmem [shape: f32[1,128], index: 2, kind: input, shape index: {}]
  %s3 = inlined_call_operand.hbm [shape: f32[128,128], index: 3, kind: input, shape index: {}]
  %s4 = inlined_call_operand.vmem [shape: f32[1,128], index: 4, kind: input, shape index: {}]
  %s5 = inlined_call_operand.hbm [shape: f32[128,128], index: 5, kind: input, shape index: {}]
  %s6 = inlined_call_operand.vmem [shape: f32[1,128], index: 6, kind: input, shape index: {}]
  %s7 = inlined_call_operand.hbm [shape: f32[8,128], index: 7, kind: output, shape index: {}]
  %s8 = sld [smem:[#allocation0]]
  $region54: #{tpu_custom_call.1} parent=0
    _
  %s10 = ssub.s32 1, %s8
  %s11 = scalar_select 0, %s10, %s8
  $region1: #{tpu_custom_call.1} parent=0
    #allocation2 [shape = 'u8[4096]{0}', space=vmem, size = 0x1000, scoped, tag = 'input window, operand 0, single buffered']
    #allocation3 [shape = 's32[1]{0}', space=sflag, size = 0x4, scoped, tag = 'scoped memory for tpu_custom_call.1']
    #allocation4 [shape = 's32[1]{0}', space=sflag, size = 0x4, scoped, tag = 'scoped memory for tpu_custom_call.1']
    #allocation5 [shape = 'u8[16384]{0}', space=vmem, size = 0x4000, scoped, tag = 'input window, operand 1, single buffered']
    #allocation6 [shape = 's32[1]{0}', space=sflag, size = 0x4, scoped, tag = 'scoped memory for tpu_custom_call.1']
    #allocation7 [shape = 'u8[65536]{0}', space=vmem, size = 0x10000, scoped, tag = 'input window, operand 3, single buffered']
    #allocation8 [shape = 'u8[65536]{0}', space=vmem, size = 0x10000, scoped, tag = 'input window, operand 5, single buffered']
    #allocation9 [shape = 's32[1]{0}', space=sflag, size = 0x4, scoped, tag = 'scoped memory for tpu_custom_call.1']
    #allocation10 [shape = 'u8[4096]{0}', space=vmem, size = 0x1000, scoped, tag = 'output window, operand 0, single buffered']
    %12 = vsyncpa [#allocation3], 0
    %13 = vsyncpa [#allocation6], 0
    %14 = vsyncpa [#allocation9], 0
    %15 = vsyncpa [#allocation4], 0
    // Predicated region
    $region2: #{tpu_custom_call.1} parent=1 // pred_check
      _
    $region3: #{tpu_custom_call.1} parent=1 // pred_check_branch
      %17 = sbr.rel (0) target = $region5
    $region4: #{tpu_custom_call.1} parent=1 // pred_region
      %19 = vsyncadd [#allocation3], 0
      %s21 = sshll.u32 %s0, 4
      %s22 = int_to_ptr.hbm [resolvable:$true] %s21
      %s23 = sshll.u32 [#allocation2], 4
      %s24 = int_to_ptr.vmem [resolvable:$true] %s23
      %26 = dma.hbm_to_vmem [thread:$0]  %s22, 128, %s24, [#allocation3]
    $region5: #{tpu_custom_call.1} parent=1 // pred_fallthru
      _
    // Predicated region
    $region6: #{tpu_custom_call.1} parent=1 // pred_check
      _
    $region7: #{tpu_custom_call.1} parent=1 // pred_check_branch
      %28 = sbr.rel (0) target = $region9
    $region8: #{tpu_custom_call.1} parent=1 // pred_region
      %30 = vsyncadd [#allocation6], 0
      %s31 = sshll.u32 %s1, 4
      %s32 = int_to_ptr.hbm [resolvable:$true] %s31
      %s33 = sshll.u32 [#allocation5], 4
      %s34 = int_to_ptr.vmem [resolvable:$true] %s33
      %39 = dma.hbm_to_vmem [thread:$0]  %s32, 512, %s34, [#allocation6], 128, 128, 8
    $region9: #{tpu_custom_call.1} parent=1 // pred_fallthru
      _
    // Predicated region
    $region10: #{tpu_custom_call.1} parent=1 // pred_check
      _
    $region11: #{tpu_custom_call.1} parent=1 // pred_check_branch
      %41 = sbr.rel (0) target = $region13
    $region12: #{tpu_custom_call.1} parent=1 // pred_region
      _
    $region13: #{tpu_custom_call.1} parent=1 // pred_fallthru
      _
    // Predicated region
    $region14: #{tpu_custom_call.1} parent=1 // pred_check
      _
    $region15: #{tpu_custom_call.1} parent=1 // pred_check_branch
      %43 = sbr.rel (0) target = $region17
    $region16: #{tpu_custom_call.1} parent=1 // pred_region
      %45 = vsyncadd [#allocation6], 0
      %s46 = sshll.u32 %s3, 4
      %s47 = int_to_ptr.hbm [resolvable:$true] %s46
      %s48 = sshll.u32 [#allocation7], 4
      %s49 = int_to_ptr.vmem [resolvable:$true] %s48
      %54 = dma.hbm_to_vmem [thread:$0]  %s47, 2048, %s49, [#allocation6], 128, 128, 8
    $region17: #{tpu_custom_call.1} parent=1 // pred_fallthru
      _
    // Predicated region
    $region18: #{tpu_custom_call.1} parent=1 // pred_check
      _
    $region19: #{tpu_custom_call.1} parent=1 // pred_check_branch
      %56 = sbr.rel (0) target = $region21
    $region20: #{tpu_custom_call.1} parent=1 // pred_region
      _
    $region21: #{tpu_custom_call.1} parent=1 // pred_fallthru
      _
    // Predicated region
    $region22: #{tpu_custom_call.1} parent=1 // pred_check
      _
    $region23: #{tpu_custom_call.1} parent=1 // pred_check_branch
      %58 = sbr.rel (0) target = $region25
    $region24: #{tpu_custom_call.1} parent=1 // pred_region
      %60 = vsyncadd [#allocation9], 0
      %s61 = sshll.u32 %s5, 4
      %s62 = int_to_ptr.hbm [resolvable:$true] %s61
      %s63 = sshll.u32 [#allocation8], 4
      %s64 = int_to_ptr.vmem [resolvable:$true] %s63
      %69 = dma.hbm_to_vmem [thread:$0]  %s62, 2048, %s64, [#allocation9], 128, 128, 8
    $region25: #{tpu_custom_call.1} parent=1 // pred_fallthru
      _
    // Predicated region
    $region26: #{tpu_custom_call.1} parent=1 // pred_check
      _
    $region27: #{tpu_custom_call.1} parent=1 // pred_check_branch
      %71 = sbr.rel (0) target = $region29
    $region28: #{tpu_custom_call.1} parent=1 // pred_region
      _
    $region29: #{tpu_custom_call.1} parent=1 // pred_fallthru
      _
    // Predicated region
    $region30: #{tpu_custom_call.1} parent=1 // pred_check
      _
    $region31: #{tpu_custom_call.1} parent=1 // pred_check_branch
      %73 = sbr.rel (0) target = $region33
    $region32: #{tpu_custom_call.1} parent=1 // pred_region
      %75 = dma.done [#allocation3], 128
    $region33: #{tpu_custom_call.1} parent=1 // pred_fallthru
      _
    // Predicated region
    $region34: #{tpu_custom_call.1} parent=1 // pred_check
      _
    $region35: #{tpu_custom_call.1} parent=1 // pred_check_branch
      %77 = sbr.rel (0) target = $region37
    $region36: #{tpu_custom_call.1} parent=1 // pred_region
      %79 = dma.done [#allocation6], 512
    $region37: #{tpu_custom_call.1} parent=1 // pred_fallthru
      _
    // Predicated region
    $region38: #{tpu_custom_call.1} parent=1 // pred_check
      _
    $region39: #{tpu_custom_call.1} parent=1 // pred_check_branch
      %81 = sbr.rel (0) target = $region41
    $region40: #{tpu_custom_call.1} parent=1 // pred_region
      %83 = dma.done [#allocation6], 2048
    $region41: #{tpu_custom_call.1} parent=1 // pred_fallthru
      _
    // Predicated region
    $region42: #{tpu_custom_call.1} parent=1 // pred_check
      _
    $region43: #{tpu_custom_call.1} parent=1 // pred_check_branch
      %85 = sbr.rel (0) target = $region45
    $region44: #{tpu_custom_call.1} parent=1 // pred_region
      %87 = dma.done [#allocation9], 2048
    $region45: #{tpu_custom_call.1} parent=1 // pred_fallthru
      _
    %v88 = vld [vmem:[#allocation2] sm:$0xff]
    %v89 = vld [vmem:[#allocation5] sm:$0xff]
    %v90 = vld [vmem:[#allocation5 + $0x8] sm:$0xff]
    %v91 = vld [vmem:[#allocation5 + $0x10] sm:$0xff]
    %v92 = vld [vmem:[#allocation5 + $0x18] sm:$0xff]
    %v93 = vld [vmem:[%s2] sm:$0x1]
    %v95 = vperm.slane %v93, 0
    %vm97 = vcmask 261120
    %v99 = vsel %vm97, %v88, 0
    %101 = vmatpush.msra.mxu0 0.0
    %102 = vmatpush.msra.mxu0 0.0
    %103 = vmatpush.msra.mxu0 0.0
    %104 = vmatpush.msra.mxu0 0.0
    %105 = vmatpush.msra.mxu0 0.0
    %106 = vmatpush.msra.mxu0 0.0
    %107 = vmatpush.msra.mxu0 0.0
    %108 = vmatpush.msra.mxu0 0.0
    %109 = vmatpush.msra.mxu0 0.0
    %110 = vmatpush.msra.mxu0 0.0
    %111 = vmatpush.msra.mxu0 0.0
    %112 = vmatpush.msra.mxu0 0.0
    %113 = vmatpush.msra.mxu0 %v92
    %114 = vmatpush.msra.mxu0 %v91
    %115 = vmatpush.msra.mxu0 %v90
    %116 = vmatpush.msra.mxu0 %v89
    %117 = vmatmul.f32.gmra.mxu0 %v99
    %v118 = vpop.f32.mrf.mxu0
    %v119 = vadd.f32 %v95, %v118
    %120 = vdwg.mxu0
    %v121 = vmax.f32 %v119, 0.0
    %v122 = vld [vmem:[#allocation7] sm:$0xff]
    %v123 = vld [vmem:[#allocation7 + $0x8] sm:$0xff]
    %v124 = vld [vmem:[#allocation7 + $0x10] sm:$0xff]
    %v125 = vld [vmem:[#allocation7 + $0x18] sm:$0xff]
    %v126 = vld [vmem:[#allocation7 + $0x20] sm:$0xff]
    %v127 = vld [vmem:[#allocation7 + $0x28] sm:$0xff]
    %v128 = vld [vmem:[#allocation7 + $0x30] sm:$0xff]
    %v129 = vld [vmem:[#allocation7 + $0x38] sm:$0xff]
    %v130 = vld [vmem:[#allocation7 + $0x40] sm:$0xff]
    %v131 = vld [vmem:[#allocation7 + $0x48] sm:$0xff]
    %v132 = vld [vmem:[#allocation7 + $0x50] sm:$0xff]
    %v133 = vld [vmem:[#allocation7 + $0x58] sm:$0xff]
    %v134 = vld [vmem:[#allocation7 + $0x60] sm:$0xff]
    %v135 = vld [vmem:[#allocation7 + $0x68] sm:$0xff]
    %v136 = vld [vmem:[#allocation7 + $0x70] sm:$0xff]
    %v137 = vld [vmem:[#allocation7 + $0x78] sm:$0xff]
    %v138 = vld [vmem:[%s4] sm:$0x1]
    %v140 = vperm.slane %v138, 0
    %142 = vmatpush.msra.mxu0 %v137
    %143 = vmatpush.msra.mxu0 %v136
    %144 = vmatpush.msra.mxu0 %v135
    %145 = vmatpush.msra.mxu0 %v134
    %146 = vmatpush.msra.mxu0 %v133
    %147 = vmatpush.msra.mxu0 %v132
    %148 = vmatpush.msra.mxu0 %v131
    %149 = vmatpush.msra.mxu0 %v130
    %150 = vmatpush.msra.mxu0 %v129
    %151 = vmatpush.msra.mxu0 %v128
    %152 = vmatpush.msra.mxu0 %v127
    %153 = vmatpush.msra.mxu0 %v126
    %154 = vmatpush.msra.mxu0 %v125
    %155 = vmatpush.msra.mxu0 %v124
    %156 = vmatpush.msra.mxu0 %v123
    %157 = vmatpush.msra.mxu0 %v122
    %158 = vmatmul.f32.gmra.mxu0 %v121
    %v159 = vpop.f32.mrf.mxu0
    %v160 = vadd.f32 %v140, %v159
    %161 = vdwg.mxu0
    %v162 = vmax.f32 %v160, 0.0
    %v163 = vld [vmem:[#allocation8] sm:$0xff]
    %v164 = vld [vmem:[#allocation8 + $0x8] sm:$0xff]
    %v165 = vld [vmem:[#allocation8 + $0x10] sm:$0xff]
    %v166 = vld [vmem:[#allocation8 + $0x18] sm:$0xff]
    %v167 = vld [vmem:[#allocation8 + $0x20] sm:$0xff]
    %v168 = vld [vmem:[#allocation8 + $0x28] sm:$0xff]
    %v169 = vld [vmem:[#allocation8 + $0x30] sm:$0xff]
    %v170 = vld [vmem:[#allocation8 + $0x38] sm:$0xff]
    %v171 = vld [vmem:[#allocation8 + $0x40] sm:$0xff]
    %v172 = vld [vmem:[#allocation8 + $0x48] sm:$0xff]
    %v173 = vld [vmem:[#allocation8 + $0x50] sm:$0xff]
    %v174 = vld [vmem:[#allocation8 + $0x58] sm:$0xff]
    %v175 = vld [vmem:[#allocation8 + $0x60] sm:$0xff]
    %v176 = vld [vmem:[#allocation8 + $0x68] sm:$0xff]
    %v177 = vld [vmem:[#allocation8 + $0x70] sm:$0xff]
    %v178 = vld [vmem:[#allocation8 + $0x78] sm:$0xff]
    %v179 = vld [vmem:[%s6] sm:$0x1]
    %v181 = vperm.slane %v179, 0
    %183 = vmatpush.msra.mxu0 %v178
    %184 = vmatpush.msra.mxu0 %v177
    %185 = vmatpush.msra.mxu0 %v176
    %186 = vmatpush.msra.mxu0 %v175
    %187 = vmatpush.msra.mxu0 %v174
    %188 = vmatpush.msra.mxu0 %v173
    %189 = vmatpush.msra.mxu0 %v172
    %190 = vmatpush.msra.mxu0 %v171
    %191 = vmatpush.msra.mxu0 %v170
    %192 = vmatpush.msra.mxu0 %v169
    %193 = vmatpush.msra.mxu0 %v168
    %194 = vmatpush.msra.mxu0 %v167
    %195 = vmatpush.msra.mxu0 %v166
    %196 = vmatpush.msra.mxu0 %v165
    %197 = vmatpush.msra.mxu0 %v164
    %198 = vmatpush.msra.mxu0 %v163
    %199 = vmatmul.f32.gmra.mxu0 %v162
    %v200 = vpop.f32.mrf.mxu0
    %v201 = vadd.f32 %v181, %v200
    %202 = vdwg.mxu0
    %203 = vst [vmem:[#allocation10] sm:$0xff] %v201
    // Predicated region
    $region46: #{tpu_custom_call.1} parent=1 // pred_check
      _
    $region47: #{tpu_custom_call.1} parent=1 // pred_check_branch
      %205 = sbr.rel (0) target = $region49
    $region48: #{tpu_custom_call.1} parent=1 // pred_region
      %207 = vsyncadd [#allocation4], 0
      %s209 = sshll.u32 [#allocation10], 4
      %s210 = int_to_ptr.vmem [resolvable:$true] %s209
      %s211 = sshll.u32 %s7, 4
      %s212 = int_to_ptr.hbm [resolvable:$true] %s211
      %214 = dma.vmem_to_hbm [thread:$0]  %s210, 128, %s212, [#allocation4]
    $region49: #{tpu_custom_call.1} parent=1 // pred_fallthru
      _
    // Predicated region
    $region50: #{tpu_custom_call.1} parent=1 // pred_check
      _
    $region51: #{tpu_custom_call.1} parent=1 // pred_check_branch
      %216 = sbr.rel (0) target = $region53
    $region52: #{tpu_custom_call.1} parent=1 // pred_region
      %218 = dma.done [#allocation4], 128
    $region53: #{tpu_custom_call.1} parent=1 // pred_fallthru
      _
    %219 = vsyncpa [#allocation3], 1
    %220 = vsyncpa [#allocation6], 1
    %221 = vsyncpa [#allocation9], 1
    %222 = vsyncpa [#allocation4], 1

</llo_original>
